<compile_context>
chip_gen: v6e
topology: v6e:2x2x1
jax: 0.10.0
libtpu: 0.0.40
codegen_flags: <defaults>
</compile_context>

<pallas_src>
import math

import jax
import jax.numpy as jnp
from jax import lax
from jax.experimental import pallas as pl
from jax.experimental.pallas import tpu as pltpu

_LANES = 128                      # vreg lane width
_INV_SQRT2 = 1.0 / math.sqrt(2.0)

# Abramowitz & Stegun 7.1.26 erf coefficients (|abs err| < 1.5e-7 ~ f32 eps).
_A1, _A2, _A3, _A4, _A5 = (0.254829592, -0.284496736, 1.421413741,
                           -1.453152027, 1.061405429)
_P = 0.3275911


def _gelu_f32(x):
    """GELU(x) = x*0.5*(1+erf(x/sqrt(2))) = 0.5*(x + |x|*erf(|x|/sqrt(2)))."""
    ax = jnp.abs(x)
    z = ax * _INV_SQRT2
    d = 1.0 + _P * z                       # d >= 1, always safe to invert
    t = pl.reciprocal(d, approx=True)      # EUP slot, not a VALU divide chain
    t = t * (2.0 - d * t)                  # one Newton step -> ~f32-exact 1/d
    poly = ((((_A5 * t + _A4) * t + _A3) * t + _A2) * t + _A1) * t
    erf_abs = 1.0 - poly * jnp.exp(-z * z)  # erf(|x|/sqrt(2)) in [0, 1)
    return 0.5 * (x + ax * erf_abs)


def _gelu_kernel(x_ref, o_ref):
    # Cast on load / store: HBM traffic stays in the caller's dtype.
    x = x_ref[...].astype(jnp.float32)
    o_ref[...] = _gelu_f32(x).astype(o_ref.dtype)


def _pick_block_rows(rows, cols, itemsize, target_bytes, min_bytes, steps):
    """Block rows: ~target_bytes per block, >= min_bytes, aim for `steps` grid
    steps on medium/large inputs; aligned to the packed-sublane multiple."""
    sub = 8 * max(1, 4 // itemsize)        # f32: 8, bf16: 16, int8/fp8: 32
    bytes_per_row = cols * itemsize
    by_target = max(1, target_bytes // bytes_per_row)
    by_min = max(1, min_bytes // bytes_per_row)
    by_steps = pl.cdiv(rows, steps)
    block = min(by_target, max(by_steps, by_min), rows)
    if block < rows:
        block = max(sub, (block // sub) * sub)
        block = min(block, rows)
    return block


def gelu(x, *, target_block_bytes=2 << 20, min_block_bytes=1 << 20,
         desired_steps=8):
    """Exact-erf GELU over any shape; computed in f32, stored in x.dtype."""
    shape, dtype = x.shape, x.dtype
    size = x.size
    if size == 0:
        return x
    itemsize = jnp.dtype(dtype).itemsize
    last = shape[-1] if x.ndim >= 1 else 1

    padded = False
    if x.ndim >= 2 and last % _LANES == 0 and last * itemsize <= target_block_bytes:
        cols = last                         # keep the (lane-dense) hidden dim
        x2d = x.reshape(-1, cols)           # free reshape, no copy
    elif size % _LANES == 0:
        cols = _LANES
        x2d = x.reshape(-1, cols)           # free reshape, no copy
    else:
        # Ragged fallback: flatten and zero-pad just the tail (GELU(0) == 0).
        cols = _LANES
        pad = (-size) % _LANES
        x2d = jnp.pad(x.reshape(-1), (0, pad)).reshape(-1, cols)
        padded = True

    rows = x2d.shape[0]
    block_rows = _pick_block_rows(rows, cols, itemsize, target_block_bytes,
                                  min_block_bytes, desired_steps)
    grid = (pl.cdiv(rows, block_rows),)     # partial last block is masked

    # TODO(synk): if a trace ever shows exposed input DMA at this block size,
    # add pipeline_mode=pl.Buffered(3) to the input BlockSpec.
    y2d = pl.pallas_call(
        _gelu_kernel,
        out_shape=jax.ShapeDtypeStruct((rows, cols), dtype),
        grid=grid,
        in_specs=[pl.BlockSpec((block_rows, cols), lambda i: (i, 0))],
        out_specs=pl.BlockSpec((block_rows, cols), lambda i: (i, 0)),
        compiler_params=pltpu.CompilerParams(
            dimension_semantics=("parallel",)),
    )(x2d)

    if padded:
        return y2d.reshape(-1)[:size].reshape(shape)
    return y2d.reshape(shape)


def _gelu_ref(x):
    xf = x.astype(jnp.float32)
    return (xf * 0.5 * (1.0 + lax.erf(xf * _INV_SQRT2))).astype(x.dtype)


if __name__ == "__main__":
    key = jax.random.PRNGKey(0)
    gelu_jit = jax.jit(gelu)
    cases = [
        ((2, 8, 32), jnp.float32, 1e-4),      # toy gemma3-block sizes
        ((3, 7, 5), jnp.float32, 1e-4),       # ragged -> pad-the-tail fallback
        ((2, 16, 256), jnp.float32, 1e-4),    # lane-aligned fast path, cols=256
        ((4, 128, 256), jnp.bfloat16, 5e-2),  # bf16 in HBM, f32 compute in-kernel
    ]
    ok = True
    for i, (shape, dtype, tol) in enumerate(cases):
        k = jax.random.fold_in(key, i)
        x = (jax.random.normal(k, shape, jnp.float32) * 3.0).astype(dtype)
        out = jax.block_until_ready(gelu_jit(x))
        ref = _gelu_ref(x)
        good = (out.shape == shape and out.dtype == dtype and
                bool(jnp.allclose(out.astype(jnp.float32),
                                  ref.astype(jnp.float32),
                                  atol=tol, rtol=tol)))
        if not good:
            err = float(jnp.max(jnp.abs(out.astype(jnp.float32)
                                        - ref.astype(jnp.float32))))
            ok = False
            print(f"MISMATCH shape={shape} dtype={dtype} max_abs_err={err}")
    if ok:
        print("KERNEL_OK")
</pallas_src>

<mosaic_0001>
module attributes {stable_mosaic.version = 11 : i64} {
  func.func @_gelu_kernel(%arg0: i32, %arg1: memref<4x128xf32, #tpu.memory_space<vmem>>, %arg2: memref<4x128xf32, #tpu.memory_space<vmem>>) attributes {dimension_semantics = [#tpu.dimension_semantics<parallel>], iteration_bounds = array<i64: 1>, scalar_prefetch = 0 : i64, scratch_operands = 0 : i64, tpu.core_type = #tpu.core_type<tc>, window_params = [{transform_indices = @transform_0, window_bounds = array<i64: 4, 128>}, {transform_indices = @transform_1, window_bounds = array<i64: 4, 128>}]} {
    %c0 = arith.constant 0 : index
    %c0_0 = arith.constant 0 : index
    %0 = vector.load %arg1[%c0, %c0_0] : memref<4x128xf32, #tpu.memory_space<vmem>>, vector<4x128xf32>
    %1 = math.absf %0 : vector<4x128xf32>
    %cst = arith.constant 0.707106769 : f32
    %2 = vector.broadcast %cst : f32 to vector<4x128xf32>
    %3 = arith.mulf %1, %2 : vector<4x128xf32>
    %cst_1 = arith.constant 0.327591091 : f32
    %4 = vector.broadcast %cst_1 : f32 to vector<4x128xf32>
    %5 = arith.mulf %4, %3 : vector<4x128xf32>
    %cst_2 = arith.constant 1.000000e+00 : f32
    %6 = vector.broadcast %cst_2 : f32 to vector<4x128xf32>
    %7 = arith.addf %6, %5 : vector<4x128xf32>
    %8 = tpu.reciprocal %7 {approx = true} : vector<4x128xf32> -> vector<4x128xf32>
    %9 = arith.mulf %7, %8 : vector<4x128xf32>
    %cst_3 = arith.constant 2.000000e+00 : f32
    %10 = vector.broadcast %cst_3 : f32 to vector<4x128xf32>
    %11 = arith.subf %10, %9 : vector<4x128xf32>
    %12 = arith.mulf %8, %11 : vector<4x128xf32>
    %cst_4 = arith.constant 1.06140542 : f32
    %13 = vector.broadcast %cst_4 : f32 to vector<4x128xf32>
    %14 = arith.mulf %13, %12 : vector<4x128xf32>
    %cst_5 = arith.constant -1.45315206 : f32
    %15 = vector.broadcast %cst_5 : f32 to vector<4x128xf32>
    %16 = arith.addf %14, %15 : vector<4x128xf32>
    %17 = arith.mulf %16, %12 : vector<4x128xf32>
    %cst_6 = arith.constant 1.42141378 : f32
    %18 = vector.broadcast %cst_6 : f32 to vector<4x128xf32>
    %19 = arith.addf %17, %18 : vector<4x128xf32>
    %20 = arith.mulf %19, %12 : vector<4x128xf32>
    %cst_7 = arith.constant -0.284496725 : f32
    %21 = vector.broadcast %cst_7 : f32 to vector<4x128xf32>
    %22 = arith.addf %20, %21 : vector<4x128xf32>
    %23 = arith.mulf %22, %12 : vector<4x128xf32>
    %cst_8 = arith.constant 0.254829586 : f32
    %24 = vector.broadcast %cst_8 : f32 to vector<4x128xf32>
    %25 = arith.addf %23, %24 : vector<4x128xf32>
    %26 = arith.mulf %25, %12 : vector<4x128xf32>
    %cst_9 = arith.constant 0.000000e+00 : f32
    %27 = vector.broadcast %cst_9 : f32 to vector<4x128xf32>
    %28 = arith.subf %27, %3 : vector<4x128xf32>
    %29 = arith.mulf %28, %3 : vector<4x128xf32>
    %30 = math.exp %29 : vector<4x128xf32>
    %31 = arith.mulf %26, %30 : vector<4x128xf32>
    %cst_10 = arith.constant 1.000000e+00 : f32
    %32 = vector.broadcast %cst_10 : f32 to vector<4x128xf32>
    %33 = arith.subf %32, %31 : vector<4x128xf32>
    %34 = arith.mulf %1, %33 : vector<4x128xf32>
    %35 = arith.addf %0, %34 : vector<4x128xf32>
    %cst_11 = arith.constant 5.000000e-01 : f32
    %36 = vector.broadcast %cst_11 : f32 to vector<4x128xf32>
    %37 = arith.mulf %36, %35 : vector<4x128xf32>
    %c0_12 = arith.constant 0 : index
    %c0_13 = arith.constant 0 : index
    %38 = vector.load %arg2[%c0_12, %c0_13] : memref<4x128xf32, #tpu.memory_space<vmem>>, vector<4x128xf32>
    tpu.vector_store %arg2[%c0_12, %c0_13], %37 {strides = array<i32>} : memref<4x128xf32, #tpu.memory_space<vmem>>, vector<4x128xf32>,
    return
  }
  func.func @transform_0(%arg0: i32) -> (i32, i32) {
    %c0_i32 = arith.constant 0 : i32
    %c0_i32_0 = arith.constant 0 : i32
    return %arg0, %c0_i32 : i32, i32
  }
  func.func @transform_1(%arg0: i32) -> (i32, i32) {
    %c0_i32 = arith.constant 0 : i32
    %c0_i32_0 = arith.constant 0 : i32
    return %arg0, %c0_i32 : i32, i32
  }
}

</mosaic_0001>

<llo_original>
// kernel: gelu.1
$region0: #{gelu.1}
  #allocation0 [shape = 'u32[]', space=smem, size = 0x4, offset = 0x4, fixed_abs, tag = 'smem constant byte address 0x4 - core index']
  #allocation1 [shape = 'u32[144,128]{1,0:T(1,128)}', space=vmem, size = 0x12000, scoped, tag = 'internal scratch']
  %s0 = inlined_call_operand.vmem [shape: f32[4,128], index: 0, kind: input, shape index: {}]
  %s1 = inlined_call_operand.vmem [shape: f32[4,128], index: 1, kind: output, shape index: {}]
  %s2 = sld [smem:[#allocation0]]
  $region14: #{gelu.1} parent=0
    _
  %s4 = ssub.s32 1, %s2
  %s5 = scalar_select 0, %s4, %s2
  // Predicated region
  $region2: #{gelu.1} parent=0 // pred_check
    _
  $region3: #{gelu.1} parent=0 // pred_check_branch
    %7 = sbr.rel (0) target = $region5
  $region4: #{gelu.1} parent=0 // pred_region
    _
  $region5: #{gelu.1} parent=0 // pred_fallthru
    _
  %v8 = vld [vmem:[%s0] sm:$0xf]
  %v9 = vand.u32 2147483647, %v8
  %v10 = vmul.f32 %v9, 0.70710677
  %v11 = vmul.f32 %v10, 0.3275911
  %v12 = vadd.f32 %v11, 1.0
  %v13 = vrcp.pop %v12
  %v14 = vmul.f32 %v12, %v13
  %v15 = vsub.f32 2.0, %v14
  %v16 = vmul.f32 %v13, %v15
  %v17 = vmul.f32 %v16, 1.0614054
  %v18 = vadd.f32 %v17, -1.4531521
  %v19 = vmul.f32 %v18, %v16
  %v20 = vadd.f32 %v19, 1.4214138
  %v21 = vmul.f32 %v20, %v16
  %v22 = vadd.f32 %v21, -0.28449672
  %v23 = vmul.f32 %v22, %v16
  %v24 = vadd.f32 %v23, 0.2548296
  %v25 = vmul.f32 %v24, %v16
  %v26 = vsub.f32 0.0, %v10
  %v27 = vmul.f32 %v26, %v10
  %v28 = vmul.f32 %v27, 1.442695
  %v29 = vpow.pop %v28
  %v30 = vmul.f32 %v25, %v29
  %v31 = vsub.f32 1.0, %v30
  %v32 = vmul.f32 %v9, %v31
  %v33 = vadd.f32 %v8, %v32
  %v34 = vmul.f32 %v33, 0.5
  %35 = vst [vmem:[%s1] sm:$0xf] %v34
  // Predicated region
  $region6: #{gelu.1} parent=0 // pred_check
    _
  $region7: #{gelu.1} parent=0 // pred_check_branch
    %37 = sbr.rel (0) target = $region9
  $region8: #{gelu.1} parent=0 // pred_region
    _
  $region9: #{gelu.1} parent=0 // pred_fallthru
    _
  // Predicated region
  $region10: #{gelu.1} parent=0 // pred_check
    _
  $region11: #{gelu.1} parent=0 // pred_check_branch
    %39 = sbr.rel (0) target = $region13
  $region12: #{gelu.1} parent=0 // pred_region
    _
  $region13: #{gelu.1} parent=0 // pred_fallthru
    _

</llo_original>
